<compile_context>
chip_gen: v7x
topology: tpu7x:2x2x1
jax: 0.10.0
libtpu: 0.0.40
codegen_flags: <defaults>
</compile_context>

<pallas_src>
import functools

import jax
import jax.numpy as jnp
from jax.experimental import pallas as pl
from jax.experimental.pallas import tpu as pltpu


def _round_up(x: int, m: int) -> int:
    return ((x + m - 1) // m) * m


_VMEM_BUDGET = 40 * 1024 * 1024      # plan tiles to stay under this footprint
_VMEM_LIMIT_CAP = 48 * 1024 * 1024   # < v7x's 64 MiB physical VMEM


def _choose_tm(m_base: int, cap: int) -> int:
    """Pick an M tile (multiple of 8, <= cap) giving >= 2 grid steps when possible."""
    tm = min(cap, m_base)
    if m_base >= 16:
        # >= 2 "parallel" M tiles so v7x's second TensorCore gets work.
        tm = min(tm, _round_up((m_base + 1) // 2, 8))
    return max(tm, 8)


# --------------------------------------------------------------------------- kernels
def _mlp_resident_kernel(x_ref, w1_ref, b1_ref, w2_ref, b2_ref, o_ref):
    # Fully fused step: no K reduction axis, no accumulator scratch, no pl.when.
    h = jnp.dot(x_ref[...], w1_ref[...], preferred_element_type=jnp.float32)
    h = jnp.maximum(h + b1_ref[...], 0.0)
    out = jnp.dot(h.astype(w2_ref.dtype), w2_ref[...],
                  preferred_element_type=jnp.float32)
    o_ref[...] = (out + b2_ref[...]).astype(o_ref.dtype)


def _mlp_stream_kernel(x_ref, w1_ref, b1_ref, w2_ref, b2_ref, o_ref, acc_ref):
    k = pl.program_id(1)

    @pl.when(k == 0)
    def _init():
        acc_ref[...] = jnp.zeros_like(acc_ref)

    acc_ref[...] += jnp.dot(x_ref[...], w1_ref[...],
                            preferred_element_type=jnp.float32)

    @pl.when(k == pl.num_programs(1) - 1)
    def _finalize():
        h = jnp.maximum(acc_ref[...] + b1_ref[...], 0.0)
        out = jnp.dot(h.astype(w2_ref.dtype), w2_ref[...],
                      preferred_element_type=jnp.float32)
        o_ref[...] = (out + b2_ref[...]).astype(o_ref.dtype)


# -------------------------------------------------------------------- padded operands
def _pad_operands(x2d, w1, b1, w2, b2, m_pad, k_pad, h_pad, n_pad):
    B, K = x2d.shape
    H, N = w2.shape
    xp = jnp.zeros((m_pad, k_pad), jnp.bfloat16).at[:B, :K].set(
        x2d.astype(jnp.bfloat16))
    w1p = jnp.zeros((k_pad, h_pad), jnp.bfloat16).at[:K, :H].set(
        w1.astype(jnp.bfloat16))
    b1p = jnp.zeros((1, h_pad), jnp.float32).at[0, :H].set(b1.astype(jnp.float32))
    w2p = jnp.zeros((h_pad, n_pad), jnp.bfloat16).at[:H, :N].set(
        w2.astype(jnp.bfloat16))
    b2p = jnp.zeros((1, n_pad), jnp.float32).at[0, :N].set(b2.astype(jnp.float32))
    return xp, w1p, b1p, w2p, b2p


# ----------------------------------------------------------------------- jitted paths
@functools.partial(
    jax.jit,
    static_argnames=("tm", "m_pad", "k_pad", "h_pad", "n_pad", "vmem_limit"))
def _run_resident(x, w1, b1, w2, b2, *, tm, m_pad, k_pad, h_pad, n_pad, vmem_limit):
    x2d = x.reshape(x.shape[0], -1)
    B, K = x2d.shape
    H, N = w2.shape
    out_dtype = x2d.dtype
    xp, w1p, b1p, w2p, b2p = _pad_operands(
        x2d, w1, b1, w2, b2, m_pad, k_pad, h_pad, n_pad)

    flops = 2 * m_pad * k_pad * h_pad + 2 * m_pad * h_pad * n_pad
    bytes_accessed = (xp.size * 2 + w1p.size * 2 + w2p.size * 2
                      + b1p.size * 4 + b2p.size * 4
                      + m_pad * n_pad * jnp.dtype(out_dtype).itemsize)

    out_p = pl.pallas_call(
        _mlp_resident_kernel,
        out_shape=jax.ShapeDtypeStruct((m_pad, n_pad), out_dtype),
        grid_spec=pltpu.PrefetchScalarGridSpec(
            num_scalar_prefetch=0,
            grid=(m_pad // tm,),
            in_specs=[
                # Streamed activations.
                pl.BlockSpec((tm, k_pad), lambda i: (i, 0)),
                # Resident operands (constant block index => DMA'd once).
                pl.BlockSpec((k_pad, h_pad), lambda i: (0, 0)),
                pl.BlockSpec((1, h_pad), lambda i: (0, 0)),
                pl.BlockSpec((h_pad, n_pad), lambda i: (0, 0)),
                pl.BlockSpec((1, n_pad), lambda i: (0, 0)),
            ],
            out_specs=pl.BlockSpec((tm, n_pad), lambda i: (i, 0)),
        ),
        compiler_params=pltpu.CompilerParams(
            dimension_semantics=("parallel",),
            vmem_limit_bytes=vmem_limit),
        cost_estimate=pl.CostEstimate(flops=flops, transcendentals=0,
                                      bytes_accessed=bytes_accessed),
    )(xp, w1p, b1p, w2p, b2p)
    return out_p[:B, :N]


@functools.partial(
    jax.jit,
    static_argnames=("tm", "tk", "m_pad", "k_pad", "h_pad", "n_pad", "vmem_limit"))
def _run_stream(x, w1, b1, w2, b2, *, tm, tk, m_pad, k_pad, h_pad, n_pad, vmem_limit):
    x2d = x.reshape(x.shape[0], -1)
    B, K = x2d.shape
    H, N = w2.shape
    out_dtype = x2d.dtype
    xp, w1p, b1p, w2p, b2p = _pad_operands(
        x2d, w1, b1, w2, b2, m_pad, k_pad, h_pad, n_pad)

    n_m = m_pad // tm
    flops = 2 * m_pad * k_pad * h_pad + 2 * m_pad * h_pad * n_pad
    bytes_accessed = (xp.size * 2 + n_m * w1p.size * 2 + w2p.size * 2
                      + b1p.size * 4 + b2p.size * 4
                      + m_pad * n_pad * jnp.dtype(out_dtype).itemsize)

    out_p = pl.pallas_call(
        _mlp_stream_kernel,
        out_shape=jax.ShapeDtypeStruct((m_pad, n_pad), out_dtype),
        grid_spec=pltpu.PrefetchScalarGridSpec(
            num_scalar_prefetch=0,
            grid=(n_m, k_pad // tk),
            in_specs=[
                # Streamed tiles: activations and first-layer weights.
                pl.BlockSpec((tm, tk), lambda i, k: (i, k)),
                pl.BlockSpec((tk, h_pad), lambda i, k: (k, 0)),
                # Resident small operands.
                pl.BlockSpec((1, h_pad), lambda i, k: (0, 0)),
                pl.BlockSpec((h_pad, n_pad), lambda i, k: (0, 0)),
                pl.BlockSpec((1, n_pad), lambda i, k: (0, 0)),
            ],
            out_specs=pl.BlockSpec((tm, n_pad), lambda i, k: (i, 0)),
            scratch_shapes=[pltpu.VMEM((tm, h_pad), jnp.float32)],
        ),
        compiler_params=pltpu.CompilerParams(
            dimension_semantics=("parallel", "arbitrary"),
            vmem_limit_bytes=vmem_limit),
        cost_estimate=pl.CostEstimate(flops=flops, transcendentals=0,
                                      bytes_accessed=bytes_accessed),
    )(xp, w1p, b1p, w2p, b2p)
    return out_p[:B, :N]


# --------------------------------------------------------------------------- wrapper
def expert_mlp(x, w1, b1, w2, b2, *, force_stream=False):
    """Forward pass of ExpertMLP: flatten -> Linear(w1,b1) -> ReLU -> Linear(w2,b2).

    x:  (B, ...) flattened to (B, input_dim) if rank > 2
    w1: (input_dim, hidden_dim),  b1: (hidden_dim,)
    w2: (hidden_dim, output_dim), b2: (output_dim,)
    returns (B, output_dim) in x.dtype
    """
    B = x.shape[0]
    K = 1
    for d in x.shape[1:]:
        K *= d
    H = w1.shape[1]
    N = w2.shape[1]
    out_itemsize = jnp.dtype(x.dtype).itemsize

    k_pad = _round_up(K, 128)
    h_pad = _round_up(H, 128)
    n_pad = _round_up(N, 128)
    m_base = _round_up(B, 8)

    # ---- primary path: weights fully VMEM-resident, no K reduction axis ----
    if not force_stream:
        # 2x on residents: conservative allowance for the pipeline's buffering.
        resident_bytes = 2 * (k_pad * h_pad * 2 + h_pad * n_pad * 2
                              + h_pad * 4 + n_pad * 4)
        tm_cap = _choose_tm(m_base, cap=256)
        for tm in sorted({tm_cap, 128, 64, 32, 16, 8}, reverse=True):
            if tm > tm_cap:
                continue
            footprint = (resident_bytes
                         + 2 * tm * k_pad * 2               # double-buffered x tile
                         + 2 * tm * n_pad * out_itemsize    # double-buffered out tile
                         + tm * (h_pad * 6 + n_pad * 4))    # h (f32 + bf16) + out f32
            if footprint <= _VMEM_BUDGET:
                m_pad = _round_up(B, tm)
                vmem_limit = int(min(_VMEM_LIMIT_CAP,
                                     max(32 * 1024 * 1024, 2 * footprint)))
                return _run_resident(x, w1, b1, w2, b2,
                                     tm=tm, m_pad=m_pad, k_pad=k_pad,
                                     h_pad=h_pad, n_pad=n_pad,
                                     vmem_limit=vmem_limit)

    # ---- fallback: stream x and w1 tiles over a K reduction axis ----
    # TODO(synk): production expert widths where w2 / the (tm, h_pad) accumulator
    # exceed VMEM additionally need an N grid axis streaming w2 tiles.
    q = k_pad // 128
    tk = 128 * next(f for f in (4, 3, 2, 1) if q % f == 0)  # divides k_pad exactly
    resident_bytes = 2 * (h_pad * n_pad * 2 + h_pad * 4 + n_pad * 4)
    tm_cap = _choose_tm(m_base, cap=512)                    # big tm => fewer w1 re-reads
    chosen = None
    for tm in sorted({tm_cap, 512, 256, 128, 64, 32, 16, 8}, reverse=True):
        if tm > tm_cap:
            continue
        footprint = (resident_bytes
                     + 2 * tm * tk * 2                      # double-buffered x tile
                     + 2 * tk * h_pad * 2                   # double-buffered w1 tile
                     + 2 * tm * n_pad * out_itemsize        # double-buffered out tile
                     + tm * (h_pad * 4                      # f32 accumulator scratch
                             + h_pad * 2 + n_pad * 4))      # h bf16 + out f32 temps
        chosen = (tm, footprint)
        if footprint <= _VMEM_BUDGET:
            break
    tm, footprint = chosen
    m_pad = _round_up(B, tm)
    vmem_limit = int(min(_VMEM_LIMIT_CAP, max(32 * 1024 * 1024, 2 * footprint)))
    return _run_stream(x, w1, b1, w2, b2,
                       tm=tm, tk=tk, m_pad=m_pad, k_pad=k_pad,
                       h_pad=h_pad, n_pad=n_pad, vmem_limit=vmem_limit)


# ------------------------------------------------------------------------------ main
if __name__ == "__main__":
    # Shapes implied by the module: image-like input flattened to input_dim.
    B, C, Hc, Wc = 2, 4, 16, 16
    input_dim = C * Hc * Wc          # 1024
    hidden_dim = 32
    output_dim = 16

    key = jax.random.PRNGKey(0)
    kx, kw1, kb1, kw2, kb2 = jax.random.split(key, 5)

    x = jax.random.normal(kx, (B, C, Hc, Wc), dtype=jnp.float32)
    # Deterministic synthetic parameters (transposed Linear layout: (in, out)).
    w1 = jax.random.normal(kw1, (input_dim, hidden_dim), dtype=jnp.float32) * 0.02
    b1 = jax.random.normal(kb1, (hidden_dim,), dtype=jnp.float32) * 0.02
    w2 = jax.random.normal(kw2, (hidden_dim, output_dim), dtype=jnp.float32) * 0.02
    b2 = jax.random.normal(kb2, (output_dim,), dtype=jnp.float32) * 0.02

    out = expert_mlp(x, w1, b1, w2, b2)
    jax.block_until_ready(out)
    assert out.shape == (B, output_dim)
    assert out.dtype == x.dtype

    # Reference with the same bf16 operand quantization (f32 accumulation),
    # matching the kernel's MXU-input dtype plan.
    x_flat = x.reshape(B, -1)
    xq = x_flat.astype(jnp.bfloat16).astype(jnp.float32)
    w1q = w1.astype(jnp.bfloat16).astype(jnp.float32)
    w2q = w2.astype(jnp.bfloat16).astype(jnp.float32)
    h_ref = jnp.maximum(xq @ w1q + b1, 0.0)
    ref = h_ref.astype(jnp.bfloat16).astype(jnp.float32) @ w2q + b2
    assert jnp.allclose(out, ref, atol=1e-2, rtol=1e-2)

    # Sanity check against the full-f32 PyTorch semantics (looser: bf16 operands).
    ref_f32 = jnp.maximum(x_flat @ w1 + b1, 0.0) @ w2 + b2
    assert jnp.allclose(out, ref_f32, atol=5e-2, rtol=5e-2)

    # Also exercise the streaming-fallback path (K reduction grid) at these shapes.
    out_s = expert_mlp(x, w1, b1, w2, b2, force_stream=True)
    jax.block_until_ready(out_s)
    assert jnp.allclose(out_s, ref, atol=1e-2, rtol=1e-2)

    # Multi-M-tile resident path (>= 2 "parallel" grid steps for v7x megacore).
    xb = jax.random.normal(kx, (64, C, Hc, Wc), dtype=jnp.float32)
    out_b = expert_mlp(xb, w1, b1, w2, b2)
    jax.block_until_ready(out_b)
    xbq = xb.reshape(64, -1).astype(jnp.bfloat16).astype(jnp.float32)
    hb_ref = jnp.maximum(xbq @ w1q + b1, 0.0)
    refb = hb_ref.astype(jnp.bfloat16).astype(jnp.float32) @ w2q + b2
    assert out_b.shape == (64, output_dim)
    assert jnp.allclose(out_b, refb, atol=1e-2, rtol=1e-2)

    print("KERNEL_OK")
</pallas_src>

<mosaic_0001>
module attributes {stable_mosaic.version = 11 : i64} {
  func.func @_mlp_resident_kernel(%arg0: i32, %arg1: memref<8x1024xbf16, #tpu.memory_space<vmem>>, %arg2: memref<1024x128xbf16, #tpu.memory_space<vmem>>, %arg3: memref<1x128xf32, #tpu.memory_space<vmem>>, %arg4: memref<128x128xbf16, #tpu.memory_space<vmem>>, %arg5: memref<1x128xf32, #tpu.memory_space<vmem>>, %arg6: memref<8x128xf32, #tpu.memory_space<vmem>>) attributes {dimension_semantics = [#tpu.dimension_semantics<parallel>], iteration_bounds = array<i64: 1>, scalar_prefetch = 0 : i64, scratch_operands = 0 : i64, tpu.core_type = #tpu.core_type<tc>, window_params = [{transform_indices = @transform_0, window_bounds = array<i64: 8, 1024>}, {pipeline_mode = #tpu.pipeline_mode<synchronous>, transform_indices = @transform_1, window_bounds = array<i64: 1024, 128>}, {pipeline_mode = #tpu.pipeline_mode<synchronous>, transform_indices = @transform_2, window_bounds = array<i64: 1, 128>}, {pipeline_mode = #tpu.pipeline_mode<synchronous>, transform_indices = @transform_3, window_bounds = array<i64: 128, 128>}, {pipeline_mode = #tpu.pipeline_mode<synchronous>, transform_indices = @transform_4, window_bounds = array<i64: 1, 128>}, {transform_indices = @transform_5, window_bounds = array<i64: 8, 128>}]} {
    %c0 = arith.constant 0 : index
    %c0_0 = arith.constant 0 : index
    %0 = vector.load %arg1[%c0, %c0_0] : memref<8x1024xbf16, #tpu.memory_space<vmem>>, vector<8x1024xbf16>
    %c0_1 = arith.constant 0 : index
    %c0_2 = arith.constant 0 : index
    %1 = vector.load %arg2[%c0_1, %c0_2] : memref<1024x128xbf16, #tpu.memory_space<vmem>>, vector<1024x128xbf16>
    %cst = arith.constant dense<0.000000e+00> : vector<8x128xf32>
    %2 = tpu.matmul %0, %1, %cst {dimension_numbers = #tpu.dot_dimension_numbers<[1], [0], [0], [1], [0, 0, 1, 1], [], []>} : vector<8x1024xbf16>, vector<1024x128xbf16>, vector<8x128xf32> -> vector<8x128xf32>
    %c0_3 = arith.constant 0 : index
    %c0_4 = arith.constant 0 : index
    %3 = vector.load %arg3[%c0_3, %c0_4] : memref<1x128xf32, #tpu.memory_space<vmem>>, vector<1x128xf32>
    %4 = vector.broadcast %3 : vector<1x128xf32> to vector<8x128xf32>
    %5 = arith.addf %2, %4 : vector<8x128xf32>
    %cst_5 = arith.constant 0.000000e+00 : f32
    %6 = vector.broadcast %cst_5 : f32 to vector<8x128xf32>
    %7 = arith.maximumf %5, %6 : vector<8x128xf32>
    %8 = arith.truncf %7 : vector<8x128xf32> to vector<8x128xbf16>
    %c0_6 = arith.constant 0 : index
    %c0_7 = arith.constant 0 : index
    %9 = vector.load %arg4[%c0_6, %c0_7] : memref<128x128xbf16, #tpu.memory_space<vmem>>, vector<128x128xbf16>
    %cst_8 = arith.constant dense<0.000000e+00> : vector<8x128xf32>
    %10 = tpu.matmul %8, %9, %cst_8 {dimension_numbers = #tpu.dot_dimension_numbers<[1], [0], [0], [1], [0, 0, 1, 1], [], []>} : vector<8x128xbf16>, vector<128x128xbf16>, vector<8x128xf32> -> vector<8x128xf32>
    %c0_9 = arith.constant 0 : index
    %c0_10 = arith.constant 0 : index
    %11 = vector.load %arg5[%c0_9, %c0_10] : memref<1x128xf32, #tpu.memory_space<vmem>>, vector<1x128xf32>
    %12 = vector.broadcast %11 : vector<1x128xf32> to vector<8x128xf32>
    %13 = arith.addf %10, %12 : vector<8x128xf32>
    %c0_11 = arith.constant 0 : index
    %c0_12 = arith.constant 0 : index
    %14 = vector.load %arg6[%c0_11, %c0_12] : memref<8x128xf32, #tpu.memory_space<vmem>>, vector<8x128xf32>
    tpu.vector_store %arg6[%c0_11, %c0_12], %13 {strides = array<i32>} : memref<8x128xf32, #tpu.memory_space<vmem>>, vector<8x128xf32>,
    return
  }
  func.func @transform_0(%arg0: i32) -> (i32, i32) {
    %c0_i32 = arith.constant 0 : i32
    %c0_i32_0 = arith.constant 0 : i32
    return %arg0, %c0_i32 : i32, i32
  }
  func.func @transform_1(%arg0: i32) -> (i32, i32) {
    %c0_i32 = arith.constant 0 : i32
    %c0_i32_0 = arith.constant 0 : i32
    %c0_i32_1 = arith.constant 0 : i32
    return %c0_i32, %c0_i32_0 : i32, i32
  }
  func.func @transform_2(%arg0: i32) -> (i32, i32) {
    %c0_i32 = arith.constant 0 : i32
    %c0_i32_0 = arith.constant 0 : i32
    %c0_i32_1 = arith.constant 0 : i32
    return %c0_i32, %c0_i32_0 : i32, i32
  }
  func.func @transform_3(%arg0: i32) -> (i32, i32) {
    %c0_i32 = arith.constant 0 : i32
    %c0_i32_0 = arith.constant 0 : i32
    %c0_i32_1 = arith.constant 0 : i32
    return %c0_i32, %c0_i32_0 : i32, i32
  }
  func.func @transform_4(%arg0: i32) -> (i32, i32) {
    %c0_i32 = arith.constant 0 : i32
    %c0_i32_0 = arith.constant 0 : i32
    %c0_i32_1 = arith.constant 0 : i32
    return %c0_i32, %c0_i32_0 : i32, i32
  }
  func.func @transform_5(%arg0: i32) -> (i32, i32) {
    %c0_i32 = arith.constant 0 : i32
    %c0_i32_0 = arith.constant 0 : i32
    return %arg0, %c0_i32 : i32, i32
  }
}

</mosaic_0001>

<llo_original>
// kernel: _run_resident.1
$region0: #{_run_resident.1}
  #allocation0 [shape = 'u32[]', space=smem, size = 0x4, offset = 0x4, fixed_abs, tag = 'smem constant byte address 0x4 - core index']
  #allocation1 [shape = 'u32[144,128]{1,0:T(1,128)}', space=vmem, size = 0x12000, scoped, tag = 'internal scratch']
  %s0 = inlined_call_operand.vmem [shape: bf16[8,1024], index: 0, kind: input, shape index: {}]
  %s1 = inlined_call_operand.vmem [shape: bf16[1024,128], index: 1, kind: input, shape index: {}]
  %s2 = inlined_call_operand.vmem [shape: f32[1,128], index: 2, kind: input, shape index: {}]
  %s3 = inlined_call_operand.vmem [shape: bf16[128,128], index: 3, kind: input, shape index: {}]
  %s4 = inlined_call_operand.vmem [shape: f32[1,128], index: 4, kind: input, shape index: {}]
  %s5 = inlined_call_operand.vmem [shape: f32[8,128], index: 5, kind: output, shape index: {}]
  %s6 = sld [smem:[#allocation0]]
  $region30: #{_run_resident.1} parent=0
    _
  %s8 = ssub.s32 1, %s6
  %s9 = scalar_select 0, %s8, %s6
  // Predicated region
  $region2: #{_run_resident.1} parent=0 // pred_check
    _
  $region3: #{_run_resident.1} parent=0 // pred_check_branch
    %11 = sbr.rel (0) target = $region5
  $region4: #{_run_resident.1} parent=0 // pred_region
    _
  $region5: #{_run_resident.1} parent=0 // pred_fallthru
    _
  // Predicated region
  $region6: #{_run_resident.1} parent=0 // pred_check
    _
  $region7: #{_run_resident.1} parent=0 // pred_check_branch
    %13 = sbr.rel (0) target = $region9
  $region8: #{_run_resident.1} parent=0 // pred_region
    _
  $region9: #{_run_resident.1} parent=0 // pred_fallthru
    _
  // Predicated region
  $region10: #{_run_resident.1} parent=0 // pred_check
    _
  $region11: #{_run_resident.1} parent=0 // pred_check_branch
    %15 = sbr.rel (0) target = $region13
  $region12: #{_run_resident.1} parent=0 // pred_region
    _
  $region13: #{_run_resident.1} parent=0 // pred_fallthru
    _
  // Predicated region
  $region14: #{_run_resident.1} parent=0 // pred_check
    _
  $region15: #{_run_resident.1} parent=0 // pred_check_branch
    %17 = sbr.rel (0) target = $region17
  $region16: #{_run_resident.1} parent=0 // pred_region
    _
  $region17: #{_run_resident.1} parent=0 // pred_fallthru
    _
  // Predicated region
  $region18: #{_run_resident.1} parent=0 // pred_check
    _
  $region19: #{_run_resident.1} parent=0 // pred_check_branch
    %19 = sbr.rel (0) target = $region21
  $region20: #{_run_resident.1} parent=0 // pred_region
    _
  $region21: #{_run_resident.1} parent=0 // pred_fallthru
    _
  %v21 = vld [vmem:[%s0] sm:$0xff]
  %v22 = vld [vmem:[%s0 + $0x8] sm:$0xff]
  %v23 = vld [vmem:[%s0 + $0x10] sm:$0xff]
  %v24 = vld [vmem:[%s0 + $0x18] sm:$0xff]
  %v25 = vld [vmem:[%s1] sm:$0xf]
  %v26 = vld [vmem:[%s1 + $0x4] sm:$0xf]
  %v27 = vld [vmem:[%s1 + $0x8] sm:$0xf]
  %v28 = vld [vmem:[%s1 + $0xc] sm:$0xf]
  %v29 = vld [vmem:[%s1 + $0x10] sm:$0xf]
  %v30 = vld [vmem:[%s1 + $0x14] sm:$0xf]
  %v31 = vld [vmem:[%s1 + $0x18] sm:$0xf]
  %v32 = vld [vmem:[%s1 + $0x1c] sm:$0xf]
  %v33 = vld [vmem:[%s1 + $0x20] sm:$0xf]
  %v34 = vld [vmem:[%s1 + $0x24] sm:$0xf]
  %v35 = vld [vmem:[%s1 + $0x28] sm:$0xf]
  %v36 = vld [vmem:[%s1 + $0x2c] sm:$0xf]
  %v37 = vld [vmem:[%s1 + $0x30] sm:$0xf]
  %v38 = vld [vmem:[%s1 + $0x34] sm:$0xf]
  %v39 = vld [vmem:[%s1 + $0x38] sm:$0xf]
  %v40 = vld [vmem:[%s1 + $0x3c] sm:$0xf]
  %v41 = vld [vmem:[%s1 + $0x40] sm:$0xf]
  %v42 = vld [vmem:[%s1 + $0x44] sm:$0xf]
  %v43 = vld [vmem:[%s1 + $0x48] sm:$0xf]
  %v44 = vld [vmem:[%s1 + $0x4c] sm:$0xf]
  %v45 = vld [vmem:[%s1 + $0x50] sm:$0xf]
  %v46 = vld [vmem:[%s1 + $0x54] sm:$0xf]
  %v47 = vld [vmem:[%s1 + $0x58] sm:$0xf]
  %v48 = vld [vmem:[%s1 + $0x5c] sm:$0xf]
  %v49 = vld [vmem:[%s1 + $0x60] sm:$0xf]
  %v50 = vld [vmem:[%s1 + $0x64] sm:$0xf]
  %v51 = vld [vmem:[%s1 + $0x68] sm:$0xf]
  %v52 = vld [vmem:[%s1 + $0x6c] sm:$0xf]
  %v53 = vld [vmem:[%s1 + $0x70] sm:$0xf]
  %v54 = vld [vmem:[%s1 + $0x74] sm:$0xf]
  %v55 = vld [vmem:[%s1 + $0x78] sm:$0xf]
  %v56 = vld [vmem:[%s1 + $0x7c] sm:$0xf]
  %v57 = vld [vmem:[%s1 + $0x80] sm:$0xf]
  %v58 = vld [vmem:[%s1 + $0x84] sm:$0xf]
  %v59 = vld [vmem:[%s1 + $0x88] sm:$0xf]
  %v60 = vld [vmem:[%s1 + $0x8c] sm:$0xf]
  %v61 = vld [vmem:[%s1 + $0x90] sm:$0xf]
  %v62 = vld [vmem:[%s1 + $0x94] sm:$0xf]
  %v63 = vld [vmem:[%s1 + $0x98] sm:$0xf]
  %v64 = vld [vmem:[%s1 + $0x9c] sm:$0xf]
  %v65 = vld [vmem:[%s1 + $0xa0] sm:$0xf]
  %v66 = vld [vmem:[%s1 + $0xa4] sm:$0xf]
  %v67 = vld [vmem:[%s1 + $0xa8] sm:$0xf]
  %v68 = vld [vmem:[%s1 + $0xac] sm:$0xf]
  %v69 = vld [vmem:[%s1 + $0xb0] sm:$0xf]
  %v70 = vld [vmem:[%s1 + $0xb4] sm:$0xf]
  %v71 = vld [vmem:[%s1 + $0xb8] sm:$0xf]
  %v72 = vld [vmem:[%s1 + $0xbc] sm:$0xf]
  %v73 = vld [vmem:[%s1 + $0xc0] sm:$0xf]
  %v74 = vld [vmem:[%s1 + $0xc4] sm:$0xf]
  %v75 = vld [vmem:[%s1 + $0xc8] sm:$0xf]
  %v76 = vld [vmem:[%s1 + $0xcc] sm:$0xf]
  %v77 = vld [vmem:[%s1 + $0xd0] sm:$0xf]
  %v78 = vld [vmem:[%s1 + $0xd4] sm:$0xf]
  %v79 = vld [vmem:[%s1 + $0xd8] sm:$0xf]
  %v80 = vld [vmem:[%s1 + $0xdc] sm:$0xf]
  %v81 = vld [vmem:[%s1 + $0xe0] sm:$0xf]
  %v82 = vld [vmem:[%s1 + $0xe4] sm:$0xf]
  %v83 = vld [vmem:[%s1 + $0xe8] sm:$0xf]
  %v84 = vld [vmem:[%s1 + $0xec] sm:$0xf]
  %v85 = vld [vmem:[%s1 + $0xf0] sm:$0xf]
  %v86 = vld [vmem:[%s1 + $0xf4] sm:$0xf]
  %v87 = vld [vmem:[%s1 + $0xf8] sm:$0xf]
  %v88 = vld [vmem:[%s1 + $0xfc] sm:$0xf]
  %v89 = vld [vmem:[%s1 + $0x100] sm:$0xf]
  %v90 = vld [vmem:[%s1 + $0x104] sm:$0xf]
  %v91 = vld [vmem:[%s1 + $0x108] sm:$0xf]
  %v92 = vld [vmem:[%s1 + $0x10c] sm:$0xf]
  %v93 = vld [vmem:[%s1 + $0x110] sm:$0xf]
  %v94 = vld [vmem:[%s1 + $0x114] sm:$0xf]
  %v95 = vld [vmem:[%s1 + $0x118] sm:$0xf]
  %v96 = vld [vmem:[%s1 + $0x11c] sm:$0xf]
  %v97 = vld [vmem:[%s1 + $0x120] sm:$0xf]
  %v98 = vld [vmem:[%s1 + $0x124] sm:$0xf]
  %v99 = vld [vmem:[%s1 + $0x128] sm:$0xf]
  %v100 = vld [vmem:[%s1 + $0x12c] sm:$0xf]
  %v101 = vld [vmem:[%s1 + $0x130] sm:$0xf]
  %v102 = vld [vmem:[%s1 + $0x134] sm:$0xf]
  %v103 = vld [vmem:[%s1 + $0x138] sm:$0xf]
  %v104 = vld [vmem:[%s1 + $0x13c] sm:$0xf]
  %v105 = vld [vmem:[%s1 + $0x140] sm:$0xf]
  %v106 = vld [vmem:[%s1 + $0x144] sm:$0xf]
  %v107 = vld [vmem:[%s1 + $0x148] sm:$0xf]
  %v108 = vld [vmem:[%s1 + $0x14c] sm:$0xf]
  %v109 = vld [vmem:[%s1 + $0x150] sm:$0xf]
  %v110 = vld [vmem:[%s1 + $0x154] sm:$0xf]
  %v111 = vld [vmem:[%s1 + $0x158] sm:$0xf]
  %v112 = vld [vmem:[%s1 + $0x15c] sm:$0xf]
  %v113 = vld [vmem:[%s1 + $0x160] sm:$0xf]
  %v114 = vld [vmem:[%s1 + $0x164] sm:$0xf]
  %v115 = vld [vmem:[%s1 + $0x168] sm:$0xf]
  %v116 = vld [vmem:[%s1 + $0x16c] sm:$0xf]
  %v117 = vld [vmem:[%s1 + $0x170] sm:$0xf]
  %v118 = vld [vmem:[%s1 + $0x174] sm:$0xf]
  %v119 = vld [vmem:[%s1 + $0x178] sm:$0xf]
  %v120 = vld [vmem:[%s1 + $0x17c] sm:$0xf]
  %v121 = vld [vmem:[%s1 + $0x180] sm:$0xf]
  %v122 = vld [vmem:[%s1 + $0x184] sm:$0xf]
  %v123 = vld [vmem:[%s1 + $0x188] sm:$0xf]
  %v124 = vld [vmem:[%s1 + $0x18c] sm:$0xf]
  %v125 = vld [vmem:[%s1 + $0x190] sm:$0xf]
  %v126 = vld [vmem:[%s1 + $0x194] sm:$0xf]
  %v127 = vld [vmem:[%s1 + $0x198] sm:$0xf]
  %v128 = vld [vmem:[%s1 + $0x19c] sm:$0xf]
  %v129 = vld [vmem:[%s1 + $0x1a0] sm:$0xf]
  %v130 = vld [vmem:[%s1 + $0x1a4] sm:$0xf]
  %v131 = vld [vmem:[%s1 + $0x1a8] sm:$0xf]
  %v132 = vld [vmem:[%s1 + $0x1ac] sm:$0xf]
  %v133 = vld [vmem:[%s1 + $0x1b0] sm:$0xf]
  %v134 = vld [vmem:[%s1 + $0x1b4] sm:$0xf]
  %v135 = vld [vmem:[%s1 + $0x1b8] sm:$0xf]
  %v136 = vld [vmem:[%s1 + $0x1bc] sm:$0xf]
  %v137 = vld [vmem:[%s1 + $0x1c0] sm:$0xf]
  %v138 = vld [vmem:[%s1 + $0x1c4] sm:$0xf]
  %v139 = vld [vmem:[%s1 + $0x1c8] sm:$0xf]
  %v140 = vld [vmem:[%s1 + $0x1cc] sm:$0xf]
  %v141 = vld [vmem:[%s1 + $0x1d0] sm:$0xf]
  %v142 = vld [vmem:[%s1 + $0x1d4] sm:$0xf]
  %v143 = vld [vmem:[%s1 + $0x1d8] sm:$0xf]
  %v144 = vld [vmem:[%s1 + $0x1dc] sm:$0xf]
  %v145 = vld [vmem:[%s1 + $0x1e0] sm:$0xf]
  %v146 = vld [vmem:[%s1 + $0x1e4] sm:$0xf]
  %v147 = vld [vmem:[%s1 + $0x1e8] sm:$0xf]
  %v148 = vld [vmem:[%s1 + $0x1ec] sm:$0xf]
  %v149 = vld [vmem:[%s1 + $0x1f0] sm:$0xf]
  %v150 = vld [vmem:[%s1 + $0x1f4] sm:$0xf]
  %v151 = vld [vmem:[%s1 + $0x1f8] sm:$0xf]
  %v152 = vld [vmem:[%s1 + $0x1fc] sm:$0xf]
  %v153 = vld [vmem:[%s2] sm:$0x1]
  %v155 = vlaneseq
  %v156 = vshrl.u32 %v155, 7
  %v157 = vsub.s32 0, %v156
  %v158 = vrot.slane %v153, %v157
  %v164 = vunpack.c.l.b16 %v21
  %v165 = vunpack.c.h.b16 %v21
  %v166 = vunpack.c.l.b16 %v22
  %v167 = vunpack.c.h.b16 %v22
  %v168 = vunpack.c.l.b16 %v23
  %v169 = vunpack.c.h.b16 %v23
  %v170 = vunpack.c.l.b16 %v24
  %v171 = vunpack.c.h.b16 %v24
  %v172 = vpack.c.b16 %v164, %v164
  %v173 = vpack.c.b16 %v165, %v165
  %v174 = vpack.c.b16 %v166, %v166
  %v175 = vpack.c.b16 %v167, %v167
  %v176 = vpack.c.b16 %v168, %v168
  %v177 = vpack.c.b16 %v169, %v169
  %v178 = vpack.c.b16 %v170, %v170
  %v179 = vpack.c.b16 %v171, %v171
  %v316 = vunpack.c.l.b16 %v25
  %v317 = vunpack.c.l.b16 %v26
  %v318 = vunpack.c.l.b16 %v27
  %v319 = vunpack.c.l.b16 %v28
  %v320 = vunpack.c.l.b16 %v29
  %v321 = vunpack.c.l.b16 %v30
  %v322 = vunpack.c.l.b16 %v31
  %v323 = vunpack.c.l.b16 %v32
  %v324 = vunpack.c.l.b16 %v33
  %v325 = vunpack.c.l.b16 %v34
  %v326 = vunpack.c.l.b16 %v35
  %v327 = vunpack.c.l.b16 %v36
  %v328 = vunpack.c.l.b16 %v37
  %v329 = vunpack.c.l.b16 %v38
  %v330 = vunpack.c.l.b16 %v39
  %v331 = vunpack.c.l.b16 %v40
  %v332 = vunpack.c.l.b16 %v41
  %v333 = vunpack.c.l.b16 %v42
  %v334 = vunpack.c.l.b16 %v43
  %v335 = vunpack.c.l.b16 %v44
  %v336 = vunpack.c.l.b16 %v45
  %v337 = vunpack.c.l.b16 %v46
  %v338 = vunpack.c.l.b16 %v47
  %v339 = vunpack.c.l.b16 %v48
  %v340 = vunpack.c.l.b16 %v49
  %v341 = vunpack.c.l.b16 %v50
  %v342 = vunpack.c.l.b16 %v51
  %v343 = vunpack.c.l.b16 %v52
  %v344 = vunpack.c.l.b16 %v53
  %v345 = vunpack.c.l.b16 %v54
  %v346 = vunpack.c.l.b16 %v55
  %v347 = vunpack.c.l.b16 %v56
  %v348 = vunpack.c.l.b16 %v57
  %v349 = vunpack.c.l.b16 %v58
  %v350 = vunpack.c.l.b16 %v59
  %v351 = vunpack.c.l.b16 %v60
  %v352 = vunpack.c.l.b16 %v61
  %v353 = vunpack.c.l.b16 %v62
  %v354 = vunpack.c.l.b16 %v63
  %v355 = vunpack.c.l.b16 %v64
  %v356 = vunpack.c.l.b16 %v65
  %v357 = vunpack.c.l.b16 %v66
  %v358 = vunpack.c.l.b16 %v67
  %v359 = vunpack.c.l.b16 %v68
  %v360 = vunpack.c.l.b16 %v69
  %v361 = vunpack.c.l.b16 %v70
  %v362 = vunpack.c.l.b16 %v71
  %v363 = vunpack.c.l.b16 %v72
  %v364 = vunpack.c.l.b16 %v73
  %v365 = vunpack.c.l.b16 %v74
  %v366 = vunpack.c.l.b16 %v75
  %v367 = vunpack.c.l.b16 %v76
  %v368 = vunpack.c.l.b16 %v77
  %v369 = vunpack.c.l.b16 %v78
  %v370 = vunpack.c.l.b16 %v79
  %v371 = vunpack.c.l.b16 %v80
  %v372 = vunpack.c.l.b16 %v81
  %v373 = vunpack.c.l.b16 %v82
  %v374 = vunpack.c.l.b16 %v83
  %v375 = vunpack.c.l.b16 %v84
  %v376 = vunpack.c.l.b16 %v85
  %v377 = vunpack.c.l.b16 %v86
  %v378 = vunpack.c.l.b16 %v87
  %v379 = vunpack.c.l.b16 %v88
  %v380 = vunpack.c.l.b16 %v89
  %v381 = vunpack.c.l.b16 %v90
  %v382 = vunpack.c.l.b16 %v91
  %v383 = vunpack.c.l.b16 %v92
  %v384 = vunpack.c.l.b16 %v93
  %v385 = vunpack.c.l.b16 %v94
  %v386 = vunpack.c.l.b16 %v95
  %v387 = vunpack.c.l.b16 %v96
  %v388 = vunpack.c.l.b16 %v97
  %v389 = vunpack.c.l.b16 %v98
  %v390 = vunpack.c.l.b16 %v99
  %v391 = vunpack.c.l.b16 %v100
  %v392 = vunpack.c.l.b16 %v101
  %v393 = vunpack.c.l.b16 %v102
  %v394 = vunpack.c.l.b16 %v103
  %v395 = vunpack.c.l.b16 %v104
  %v396 = vunpack.c.l.b16 %v105
  %v397 = vunpack.c.l.b16 %v106
  %v398 = vunpack.c.l.b16 %v107
  %v399 = vunpack.c.l.b16 %v108
  %v400 = vunpack.c.l.b16 %v109
  %v401 = vunpack.c.l.b16 %v110
  %v402 = vunpack.c.l.b16 %v111
  %v403 = vunpack.c.l.b16 %v112
  %v404 = vunpack.c.l.b16 %v113
  %v405 = vunpack.c.l.b16 %v114
  %v406 = vunpack.c.l.b16 %v115
  %v407 = vunpack.c.l.b16 %v116
  %v408 = vunpack.c.l.b16 %v117
  %v409 = vunpack.c.l.b16 %v118
  %v410 = vunpack.c.l.b16 %v119
  %v411 = vunpack.c.l.b16 %v120
  %v412 = vunpack.c.l.b16 %v121
  %v413 = vunpack.c.l.b16 %v122
  %v414 = vunpack.c.l.b16 %v123
  %v415 = vunpack.c.l.b16 %v124
  %v416 = vunpack.c.l.b16 %v125
  %v417 = vunpack.c.l.b16 %v126
  %v418 = vunpack.c.l.b16 %v127
  %v419 = vunpack.c.l.b16 %v128
  %v420 = vunpack.c.l.b16 %v129
  %v421 = vunpack.c.l.b16 %v130
  %v422 = vunpack.c.l.b16 %v131
  %v423 = vunpack.c.l.b16 %v132
  %v424 = vunpack.c.l.b16 %v133
  %v425 = vunpack.c.l.b16 %v134
  %v426 = vunpack.c.l.b16 %v135
  %v427 = vunpack.c.l.b16 %v136
  %v428 = vunpack.c.l.b16 %v137
  %v429 = vunpack.c.l.b16 %v138
  %v430 = vunpack.c.l.b16 %v139
  %v431 = vunpack.c.l.b16 %v140
  %v432 = vunpack.c.l.b16 %v141
  %v433 = vunpack.c.l.b16 %v142
  %v434 = vunpack.c.l.b16 %v143
  %v435 = vunpack.c.l.b16 %v144
  %v436 = vunpack.c.l.b16 %v145
  %v437 = vunpack.c.l.b16 %v146
  %v438 = vunpack.c.l.b16 %v147
  %v439 = vunpack.c.l.b16 %v148
  %v440 = vunpack.c.l.b16 %v149
  %v441 = vunpack.c.l.b16 %v150
  %v442 = vunpack.c.l.b16 %v151
  %v443 = vunpack.c.l.b16 %v152
  %v444 = vpack.c.b16 %v317, %v316
  %v445 = vpack.c.b16 %v319, %v318
  %v446 = vpack.c.b16 %v321, %v320
  %v447 = vpack.c.b16 %v323, %v322
  %v448 = vpack.c.b16 %v325, %v324
  %v449 = vpack.c.b16 %v327, %v326
  %v450 = vpack.c.b16 %v329, %v328
  %v451 = vpack.c.b16 %v331, %v330
  %v452 = vpack.c.b16 %v333, %v332
  %v453 = vpack.c.b16 %v335, %v334
  %v454 = vpack.c.b16 %v337, %v336
  %v455 = vpack.c.b16 %v339, %v338
  %v456 = vpack.c.b16 %v341, %v340
  %v457 = vpack.c.b16 %v343, %v342
  %v458 = vpack.c.b16 %v345, %v344
  %v459 = vpack.c.b16 %v347, %v346
  %v460 = vpack.c.b16 %v349, %v348
  %v461 = vpack.c.b16 %v351, %v350
  %v462 = vpack.c.b16 %v353, %v352
  %v463 = vpack.c.b16 %v355, %v354
  %v464 = vpack.c.b16 %v357, %v356
  %v465 = vpack.c.b16 %v359, %v358
  %v466 = vpack.c.b16 %v361, %v360
  %v467 = vpack.c.b16 %v363, %v362
  %v468 = vpack.c.b16 %v365, %v364
  %v469 = vpack.c.b16 %v367, %v366
  %v470 = vpack.c.b16 %v369, %v368
  %v471 = vpack.c.b16 %v371, %v370
  %v472 = vpack.c.b16 %v373, %v372
  %v473 = vpack.c.b16 %v375, %v374
  %v474 = vpack.c.b16 %v377, %v376
  %v475 = vpack.c.b16 %v379, %v378
  %v476 = vpack.c.b16 %v381, %v380
  %v477 = vpack.c.b16 %v383, %v382
  %v478 = vpack.c.b16 %v385, %v384
  %v479 = vpack.c.b16 %v387, %v386
  %v480 = vpack.c.b16 %v389, %v388
  %v481 = vpack.c.b16 %v391, %v390
  %v482 = vpack.c.b16 %v393, %v392
  %v483 = vpack.c.b16 %v395, %v394
  %v484 = vpack.c.b16 %v397, %v396
  %v485 = vpack.c.b16 %v399, %v398
  %v486 = vpack.c.b16 %v401, %v400
  %v487 = vpack.c.b16 %v403, %v402
  %v488 = vpack.c.b16 %v405, %v404
  %v489 = vpack.c.b16 %v407, %v406
  %v490 = vpack.c.b16 %v409, %v408
  %v491 = vpack.c.b16 %v411, %v410
  %v492 = vpack.c.b16 %v413, %v412
  %v493 = vpack.c.b16 %v415, %v414
  %v494 = vpack.c.b16 %v417, %v416
  %v495 = vpack.c.b16 %v419, %v418
  %v496 = vpack.c.b16 %v421, %v420
  %v497 = vpack.c.b16 %v423, %v422
  %v498 = vpack.c.b16 %v425, %v424
  %v499 = vpack.c.b16 %v427, %v426
  %v500 = vpack.c.b16 %v429, %v428
  %v501 = vpack.c.b16 %v431, %v430
  %v502 = vpack.c.b16 %v433, %v432
  %v503 = vpack.c.b16 %v435, %v434
  %v504 = vpack.c.b16 %v437, %v436
  %v505 = vpack.c.b16 %v439, %v438
  %v506 = vpack.c.b16 %v441, %v440
  %v507 = vpack.c.b16 %v443, %v442
  %572 = vmatprep.subr.bf16.mxu0 0
  %573 = vmatpush1.bf16.msra.mxu0 %v444
  %574 = vmatprep.subr.bf16.mxu0 0
  %575 = vmatpush1.bf16.msra.mxu0 %v445
  %576 = vmatprep.subr.bf16.mxu0 0
  %577 = vmatpush1.bf16.msra.mxu0 %v446
  %578 = vmatprep.subr.bf16.mxu0 0
  %579 = vmatpush1.bf16.msra.mxu0 %v447
  %580 = vmatprep.subr.bf16.mxu0 0
  %581 = vmatpush1.bf16.msra.mxu0 %v448
  %582 = vmatprep.subr.bf16.mxu0 0
  %583 = vmatpush1.bf16.msra.mxu0 %v449
  %584 = vmatprep.subr.bf16.mxu0 0
  %585 = vmatpush1.bf16.msra.mxu0 %v450
  %586 = vmatprep.subr.bf16.mxu0 0
  %587 = vmatpush1.bf16.msra.mxu0 %v451
  %588 = vmatprep.subr.bf16.mxu0 0
  %589 = vmatpush1.bf16.msra.mxu0 %v452
  %590 = vmatprep.subr.bf16.mxu0 0
  %591 = vmatpush1.bf16.msra.mxu0 %v453
  %592 = vmatprep.subr.bf16.mxu0 0
  %593 = vmatpush1.bf16.msra.mxu0 %v454
  %594 = vmatprep.subr.bf16.mxu0 0
  %595 = vmatpush1.bf16.msra.mxu0 %v455
  %596 = vmatprep.subr.bf16.mxu0 0
  %597 = vmatpush1.bf16.msra.mxu0 %v456
  %598 = vmatprep.subr.bf16.mxu0 0
  %599 = vmatpush1.bf16.msra.mxu0 %v457
  %600 = vmatprep.subr.bf16.mxu0 0
  %601 = vmatpush1.bf16.msra.mxu0 %v458
  %602 = vmatprep.subr.bf16.mxu0 0
  %603 = vmatpush1.bf16.msra.mxu0 %v459
  %604 = vmatprep.mubr.bf16.mxu0 %v173
  %605 = vmatmul.mubr.bf16.gmra.mrb[0].mxu0 %v172
  %v606 = vpop.f32.mrb[0].mxu0
  %v607 = vadd.f32 %v158, %v606
  %v608 = vpop.f32.mrb[0].mxu0
  %v609 = vpop.f32.mrb[0].mxu0
  %v610 = vpop.f32.mrb[0].mxu0
  %611 = vdwg.mxu0
  %612 = vmatprep.subr.bf16.mxu0 0
  %613 = vmatpush1.bf16.msra.mxu0 %v460
  %614 = vmatprep.subr.bf16.mxu0 0
  %615 = vmatpush1.bf16.msra.mxu0 %v461
  %616 = vmatprep.subr.bf16.mxu0 0
  %617 = vmatpush1.bf16.msra.mxu0 %v462
  %618 = vmatprep.subr.bf16.mxu0 0
  %619 = vmatpush1.bf16.msra.mxu0 %v463
  %620 = vmatprep.subr.bf16.mxu0 0
  %621 = vmatpush1.bf16.msra.mxu0 %v464
  %622 = vmatprep.subr.bf16.mxu0 0
  %623 = vmatpush1.bf16.msra.mxu0 %v465
  %624 = vmatprep.subr.bf16.mxu0 0
  %625 = vmatpush1.bf16.msra.mxu0 %v466
  %626 = vmatprep.subr.bf16.mxu0 0
  %627 = vmatpush1.bf16.msra.mxu0 %v467
  %628 = vmatprep.subr.bf16.mxu0 0
  %629 = vmatpush1.bf16.msra.mxu0 %v468
  %630 = vmatprep.subr.bf16.mxu0 0
  %631 = vmatpush1.bf16.msra.mxu0 %v469
  %632 = vmatprep.subr.bf16.mxu0 0
  %633 = vmatpush1.bf16.msra.mxu0 %v470
  %634 = vmatprep.subr.bf16.mxu0 0
  %635 = vmatpush1.bf16.msra.mxu0 %v471
  %636 = vmatprep.subr.bf16.mxu0 0
  %637 = vmatpush1.bf16.msra.mxu0 %v472
  %638 = vmatprep.subr.bf16.mxu0 0
  %639 = vmatpush1.bf16.msra.mxu0 %v473
  %640 = vmatprep.subr.bf16.mxu0 0
  %641 = vmatpush1.bf16.msra.mxu0 %v474
  %642 = vmatprep.subr.bf16.mxu0 0
  %643 = vmatpush1.bf16.msra.mxu0 %v475
  %644 = vmatprep.mubr.bf16.mxu0 %v175
  %645 = vmatmul.mubr.bf16.gmra.mrb[0].mxu0 %v174
  %v646 = vpop.f32.mrb[0].mxu0
  %v647 = vadd.f32 %v607, %v646
  %v648 = vpop.f32.mrb[0].mxu0
  %v649 = vpop.f32.mrb[0].mxu0
  %v650 = vpop.f32.mrb[0].mxu0
  %651 = vdwg.mxu0
  %652 = vmatprep.subr.bf16.mxu0 0
  %653 = vmatpush1.bf16.msra.mxu0 %v476
  %654 = vmatprep.subr.bf16.mxu0 0
  %655 = vmatpush1.bf16.msra.mxu0 %v477
  %656 = vmatprep.subr.bf16.mxu0 0
  %657 = vmatpush1.bf16.msra.mxu0 %v478
  %658 = vmatprep.subr.bf16.mxu0 0
  %659 = vmatpush1.bf16.msra.mxu0 %v479
  %660 = vmatprep.subr.bf16.mxu0 0
  %661 = vmatpush1.bf16.msra.mxu0 %v480
  %662 = vmatprep.subr.bf16.mxu0 0
  %663 = vmatpush1.bf16.msra.mxu0 %v481
  %664 = vmatprep.subr.bf16.mxu0 0
  %665 = vmatpush1.bf16.msra.mxu0 %v482
  %666 = vmatprep.subr.bf16.mxu0 0
  %667 = vmatpush1.bf16.msra.mxu0 %v483
  %668 = vmatprep.subr.bf16.mxu0 0
  %669 = vmatpush1.bf16.msra.mxu0 %v484
  %670 = vmatprep.subr.bf16.mxu0 0
  %671 = vmatpush1.bf16.msra.mxu0 %v485
  %672 = vmatprep.subr.bf16.mxu0 0
  %673 = vmatpush1.bf16.msra.mxu0 %v486
  %674 = vmatprep.subr.bf16.mxu0 0
  %675 = vmatpush1.bf16.msra.mxu0 %v487
  %676 = vmatprep.subr.bf16.mxu0 0
  %677 = vmatpush1.bf16.msra.mxu0 %v488
  %678 = vmatprep.subr.bf16.mxu0 0
  %679 = vmatpush1.bf16.msra.mxu0 %v489
  %680 = vmatprep.subr.bf16.mxu0 0
  %681 = vmatpush1.bf16.msra.mxu0 %v490
  %682 = vmatprep.subr.bf16.mxu0 0
  %683 = vmatpush1.bf16.msra.mxu0 %v491
  %684 = vmatprep.mubr.bf16.mxu0 %v177
  %685 = vmatmul.mubr.bf16.gmra.mrb[0].mxu0 %v176
  %v686 = vpop.f32.mrb[0].mxu0
  %v687 = vadd.f32 %v647, %v686
  %v688 = vpop.f32.mrb[0].mxu0
  %v689 = vpop.f32.mrb[0].mxu0
  %v690 = vpop.f32.mrb[0].mxu0
  %691 = vdwg.mxu0
  %692 = vmatprep.subr.bf16.mxu0 0
  %693 = vmatpush1.bf16.msra.mxu0 %v492
  %694 = vmatprep.subr.bf16.mxu0 0
  %695 = vmatpush1.bf16.msra.mxu0 %v493
  %696 = vmatprep.subr.bf16.mxu0 0
  %697 = vmatpush1.bf16.msra.mxu0 %v494
  %698 = vmatprep.subr.bf16.mxu0 0
  %699 = vmatpush1.bf16.msra.mxu0 %v495
  %700 = vmatprep.subr.bf16.mxu0 0
  %701 = vmatpush1.bf16.msra.mxu0 %v496
  %702 = vmatprep.subr.bf16.mxu0 0
  %703 = vmatpush1.bf16.msra.mxu0 %v497
  %704 = vmatprep.subr.bf16.mxu0 0
  %705 = vmatpush1.bf16.msra.mxu0 %v498
  %706 = vmatprep.subr.bf16.mxu0 0
  %707 = vmatpush1.bf16.msra.mxu0 %v499
  %708 = vmatprep.subr.bf16.mxu0 0
  %709 = vmatpush1.bf16.msra.mxu0 %v500
  %710 = vmatprep.subr.bf16.mxu0 0
  %711 = vmatpush1.bf16.msra.mxu0 %v501
  %712 = vmatprep.subr.bf16.mxu0 0
  %713 = vmatpush1.bf16.msra.mxu0 %v502
  %714 = vmatprep.subr.bf16.mxu0 0
  %715 = vmatpush1.bf16.msra.mxu0 %v503
  %716 = vmatprep.subr.bf16.mxu0 0
  %717 = vmatpush1.bf16.msra.mxu0 %v504
  %718 = vmatprep.subr.bf16.mxu0 0
  %719 = vmatpush1.bf16.msra.mxu0 %v505
  %720 = vmatprep.subr.bf16.mxu0 0
  %721 = vmatpush1.bf16.msra.mxu0 %v506
  %722 = vmatprep.subr.bf16.mxu0 0
  %723 = vmatpush1.bf16.msra.mxu0 %v507
  %724 = vmatprep.mubr.bf16.mxu0 %v179
  %725 = vmatmul.mubr.bf16.gmra.mrb[0].mxu0 %v178
  %v726 = vpop.f32.mrb[0].mxu0
  %v727 = vadd.f32 %v687, %v726
  %v728 = vpop.f32.mrb[0].mxu0
  %v729 = vpop.f32.mrb[0].mxu0
  %v730 = vpop.f32.mrb[0].mxu0
  %731 = vdwg.mxu0
  %v732 = vmax.f32 %v727, 0.0
  %v733 = vpack.c.bf16 %v732, %v732
  %v734 = vld [vmem:[%s3] sm:$0xf]
  %v735 = vld [vmem:[%s3 + $0x4] sm:$0xf]
  %v736 = vld [vmem:[%s3 + $0x8] sm:$0xf]
  %v737 = vld [vmem:[%s3 + $0xc] sm:$0xf]
  %v738 = vld [vmem:[%s3 + $0x10] sm:$0xf]
  %v739 = vld [vmem:[%s3 + $0x14] sm:$0xf]
  %v740 = vld [vmem:[%s3 + $0x18] sm:$0xf]
  %v741 = vld [vmem:[%s3 + $0x1c] sm:$0xf]
  %v742 = vld [vmem:[%s3 + $0x20] sm:$0xf]
  %v743 = vld [vmem:[%s3 + $0x24] sm:$0xf]
  %v744 = vld [vmem:[%s3 + $0x28] sm:$0xf]
  %v745 = vld [vmem:[%s3 + $0x2c] sm:$0xf]
  %v746 = vld [vmem:[%s3 + $0x30] sm:$0xf]
  %v747 = vld [vmem:[%s3 + $0x34] sm:$0xf]
  %v748 = vld [vmem:[%s3 + $0x38] sm:$0xf]
  %v749 = vld [vmem:[%s3 + $0x3c] sm:$0xf]
  %v750 = vld [vmem:[%s4] sm:$0x1]
  %v752 = vlaneseq
  %v753 = vshrl.u32 %v752, 7
  %v754 = vsub.s32 0, %v753
  %v755 = vrot.slane %v750, %v754
  %v773 = vunpack.c.l.b16 %v734
  %v774 = vunpack.c.l.b16 %v735
  %v775 = vunpack.c.l.b16 %v736
  %v776 = vunpack.c.l.b16 %v737
  %v777 = vunpack.c.l.b16 %v738
  %v778 = vunpack.c.l.b16 %v739
  %v779 = vunpack.c.l.b16 %v740
  %v780 = vunpack.c.l.b16 %v741
  %v781 = vunpack.c.l.b16 %v742
  %v782 = vunpack.c.l.b16 %v743
  %v783 = vunpack.c.l.b16 %v744
  %v784 = vunpack.c.l.b16 %v745
  %v785 = vunpack.c.l.b16 %v746
  %v786 = vunpack.c.l.b16 %v747
  %v787 = vunpack.c.l.b16 %v748
  %v788 = vunpack.c.l.b16 %v749
  %v789 = vpack.c.b16 %v774, %v773
  %v790 = vpack.c.b16 %v776, %v775
  %v791 = vpack.c.b16 %v778, %v777
  %v792 = vpack.c.b16 %v780, %v779
  %v793 = vpack.c.b16 %v782, %v781
  %v794 = vpack.c.b16 %v784, %v783
  %v795 = vpack.c.b16 %v786, %v785
  %v796 = vpack.c.b16 %v788, %v787
  %805 = vmatprep.subr.bf16.mxu0 0
  %806 = vmatpush1.bf16.msra.mxu0 %v789
  %807 = vmatprep.subr.bf16.mxu0 0
  %808 = vmatpush1.bf16.msra.mxu0 %v790
  %809 = vmatprep.subr.bf16.mxu0 0
  %810 = vmatpush1.bf16.msra.mxu0 %v791
  %811 = vmatprep.subr.bf16.mxu0 0
  %812 = vmatpush1.bf16.msra.mxu0 %v792
  %813 = vmatprep.subr.bf16.mxu0 0
  %814 = vmatpush1.bf16.msra.mxu0 %v793
  %815 = vmatprep.subr.bf16.mxu0 0
  %816 = vmatpush1.bf16.msra.mxu0 %v794
  %817 = vmatprep.subr.bf16.mxu0 0
  %818 = vmatpush1.bf16.msra.mxu0 %v795
  %819 = vmatprep.subr.bf16.mxu0 0
  %820 = vmatpush1.bf16.msra.mxu0 %v796
  %821 = vmatprep.subr.bf16.mxu0 0
  %822 = vmatpush1.bf16.msra.mxu0 0
  %823 = vmatprep.subr.bf16.mxu0 0
  %824 = vmatpush1.bf16.msra.mxu0 0
  %825 = vmatprep.subr.bf16.mxu0 0
  %826 = vmatpush1.bf16.msra.mxu0 0
  %827 = vmatprep.subr.bf16.mxu0 0
  %828 = vmatpush1.bf16.msra.mxu0 0
  %829 = vmatprep.subr.bf16.mxu0 0
  %830 = vmatpush1.bf16.msra.mxu0 0
  %831 = vmatprep.subr.bf16.mxu0 0
  %832 = vmatpush1.bf16.msra.mxu0 0
  %833 = vmatprep.subr.bf16.mxu0 0
  %834 = vmatpush1.bf16.msra.mxu0 0
  %835 = vmatprep.subr.bf16.mxu0 0
  %836 = vmatpush1.bf16.msra.mxu0 0
  %837 = vmatprep.mubr.bf16.mxu0 0
  %838 = vmatmul.mubr.bf16.gmra.mrb[0].mxu0 %v733
  %v839 = vpop.f32.mrb[0].mxu0
  %v840 = vadd.f32 %v755, %v839
  %v841 = vpop.f32.mrb[0].mxu0
  %v842 = vpop.f32.mrb[0].mxu0
  %v843 = vpop.f32.mrb[0].mxu0
  %844 = vdwg.mxu0
  %845 = vst [vmem:[%s5] sm:$0xff] %v840
  // Predicated region
  $region22: #{_run_resident.1} parent=0 // pred_check
    _
  $region23: #{_run_resident.1} parent=0 // pred_check_branch
    %847 = sbr.rel (0) target = $region25
  $region24: #{_run_resident.1} parent=0 // pred_region
    _
  $region25: #{_run_resident.1} parent=0 // pred_fallthru
    _
  // Predicated region
  $region26: #{_run_resident.1} parent=0 // pred_check
    _
  $region27: #{_run_resident.1} parent=0 // pred_check_branch
    %849 = sbr.rel (0) target = $region29
  $region28: #{_run_resident.1} parent=0 // pred_region
    _
  $region29: #{_run_resident.1} parent=0 // pred_fallthru
    _

</llo_original>
